<compile_context>
chip_gen: v5e
topology: v5e:2x2
jax: 0.10.0
libtpu: 0.0.40
codegen_flags: <defaults>
</compile_context>

<pallas_src>
import functools

import jax
import jax.numpy as jnp
from jax.experimental import pallas as pl
from jax.experimental.pallas import tpu as pltpu


def _mlp_kernel(*refs, num_layers: int, compute_dtype):
    """refs = (x_ref, w0_ref, b0_ref, w1_ref, b1_ref, ..., o_ref)."""
    x_ref = refs[0]
    o_ref = refs[-1]
    param_refs = refs[1:-1]

    h = x_ref[...]
    for i in range(num_layers):
        w = param_refs[2 * i][...]
        b = param_refs[2 * i + 1][...]          # (1, out) -> broadcasts over rows
        if compute_dtype is not None:
            # Feed the MXU in a narrow dtype; accumulate in f32.
            h_in = h.astype(compute_dtype)
            w = w.astype(compute_dtype)
        else:
            h_in = h
        # MXU matmul (f32 accumulation) + VPU bias add, ReLU in f32.
        h = jnp.dot(h_in, w, preferred_element_type=jnp.float32) + b
        if i < num_layers - 1:
            h = jnp.maximum(h, 0.0)
    o_ref[...] = h.astype(o_ref.dtype)


def qnet_forward(x, params, *, batch_tile=None, compute_dtype=None):
    """Fused MLP forward.

    params: list of (W, b) with W (in, out) and b (1, out).
    batch_tile: if set (and < batch), stream batch tiles through a parallel
      grid axis with weights pinned in VMEM. Must be a multiple of 8.
    compute_dtype: optional narrow dtype (e.g. jnp.bfloat16) for MXU operands.
    """
    batch, in_f = x.shape
    num_layers = len(params)
    out_f = params[-1][0].shape[1]

    flat_params = []
    for w, b in params:
        assert b.ndim == 2 and b.shape[0] == 1, "bias must be pre-shaped (1, out)"
        flat_params.append(w)
        flat_params.append(b)

    kernel = functools.partial(
        _mlp_kernel, num_layers=num_layers, compute_dtype=compute_dtype)
    out_shape = jax.ShapeDtypeStruct((batch, out_f), x.dtype)

    if batch_tile is None or batch_tile >= batch:
        # Small-batch path: whole problem fits trivially in VMEM.
        # No grid -> no pipelining machinery, single dispatch.
        n_in = 1 + len(flat_params)
        return pl.pallas_call(
            kernel,
            out_shape=out_shape,
            in_specs=[pl.BlockSpec(memory_space=pltpu.MemorySpace.VMEM)] * n_in,
            out_specs=pl.BlockSpec(memory_space=pltpu.MemorySpace.VMEM),
        )(x, *flat_params)

    # Large-batch path: stream (TB, F) activation tiles; weights/biases map to
    # the same block every grid step, so they stay resident in VMEM.
    tb = batch_tile
    assert tb % 8 == 0, "batch_tile must be a multiple of 8 (f32 sublane)"
    grid = (pl.cdiv(batch, tb),)

    in_specs = [pl.BlockSpec((tb, in_f), lambda i: (i, 0))]
    for w, b in params:
        in_specs.append(pl.BlockSpec(w.shape, lambda i: (0, 0)))
        in_specs.append(pl.BlockSpec(b.shape, lambda i: (0, 0)))
    out_specs = pl.BlockSpec((tb, out_f), lambda i: (i, 0))

    return pl.pallas_call(
        kernel,
        out_shape=out_shape,
        grid=grid,
        in_specs=in_specs,
        out_specs=out_specs,
        compiler_params=pltpu.CompilerParams(
            dimension_semantics=("parallel",)),  # shards across TCs on v7x
    )(x, *flat_params)


def init_params(arch, key, dtype=jnp.float32):
    """Mimics torch.nn.Linear default init (U[-1/sqrt(in), 1/sqrt(in)]).

    Biases are pre-shaped (1, out) once here so no per-call reshape ops exist.
    """
    params = []
    for i in range(len(arch) - 1):
        inp, out = arch[i], arch[i + 1]
        key, kw, kb = jax.random.split(key, 3)
        bound = 1.0 / (inp ** 0.5)
        w = jax.random.uniform(kw, (inp, out), dtype, minval=-bound, maxval=bound)
        b = jax.random.uniform(kb, (1, out), dtype, minval=-bound, maxval=bound)
        params.append((w, b))
    return params


def qnet_reference(x, params):
    """Pure-JAX reference for correctness checks."""
    n = len(params)
    for idx, (w, b) in enumerate(params):
        x = x @ w + b
        if idx < n - 1:
            x = jnp.maximum(x, 0.0)
    return x


if __name__ == "__main__":
    # arch = [16, 32, 32, 8]: state_dim=16, two hidden layers of 32, 8 actions.
    arch = [16, 32, 32, 8]
    batch = 8

    key = jax.random.PRNGKey(0)
    key, kx, kxb = jax.random.split(key, 3)
    params = init_params(arch, key)

    # --- Small-batch path (single fused call, everything in VMEM, no grid) ---
    x = jax.random.normal(kx, (batch, arch[0]), dtype=jnp.float32)
    out = qnet_forward(x, params)
    out = jax.block_until_ready(out)
    ref = qnet_reference(x, params)
    assert out.shape == (batch, arch[-1])
    assert jnp.allclose(out, ref, atol=1e-5, rtol=1e-5)

    # --- Large-batch path (batch-tiled, parallel grid axis, weights resident) ---
    big_batch = 256
    x_big = jax.random.normal(kxb, (big_batch, arch[0]), dtype=jnp.float32)
    out_big = qnet_forward(x_big, params, batch_tile=128)
    out_big = jax.block_until_ready(out_big)
    ref_big = qnet_reference(x_big, params)
    assert out_big.shape == (big_batch, arch[-1])
    assert jnp.allclose(out_big, ref_big, atol=1e-5, rtol=1e-5)

    print("KERNEL_OK")
</pallas_src>

<mosaic_0001>
module attributes {stable_mosaic.version = 11 : i64} {
  func.func @_mlp_kernel(%arg0: memref<8x16xf32, #tpu.memory_space<vmem>>, %arg1: memref<16x32xf32, #tpu.memory_space<vmem>>, %arg2: memref<1x32xf32, #tpu.memory_space<vmem>>, %arg3: memref<32x32xf32, #tpu.memory_space<vmem>>, %arg4: memref<1x32xf32, #tpu.memory_space<vmem>>, %arg5: memref<32x8xf32, #tpu.memory_space<vmem>>, %arg6: memref<1x8xf32, #tpu.memory_space<vmem>>, %arg7: memref<8x8xf32, #tpu.memory_space<vmem>>) attributes {dimension_semantics = [], scalar_prefetch = 0 : i64, scratch_operands = 0 : i64, tpu.core_type = #tpu.core_type<tc>} {
    %c0 = arith.constant 0 : index
    %c0_0 = arith.constant 0 : index
    %0 = vector.load %arg0[%c0, %c0_0] : memref<8x16xf32, #tpu.memory_space<vmem>>, vector<8x16xf32>
    %c0_1 = arith.constant 0 : index
    %c0_2 = arith.constant 0 : index
    %1 = vector.load %arg1[%c0_1, %c0_2] : memref<16x32xf32, #tpu.memory_space<vmem>>, vector<16x32xf32>
    %c0_3 = arith.constant 0 : index
    %c0_4 = arith.constant 0 : index
    %2 = vector.load %arg2[%c0_3, %c0_4] : memref<1x32xf32, #tpu.memory_space<vmem>>, vector<1x32xf32>
    %cst = arith.constant dense<0.000000e+00> : vector<8x32xf32>
    %3 = tpu.matmul %0, %1, %cst {dimension_numbers = #tpu.dot_dimension_numbers<[1], [0], [0], [1], [0, 0, 1, 1], [], []>} : vector<8x16xf32>, vector<16x32xf32>, vector<8x32xf32> -> vector<8x32xf32>
    %4 = vector.broadcast %2 : vector<1x32xf32> to vector<8x32xf32>
    %5 = arith.addf %3, %4 : vector<8x32xf32>
    %cst_5 = arith.constant 0.000000e+00 : f32
    %6 = vector.broadcast %cst_5 : f32 to vector<8x32xf32>
    %7 = arith.maximumf %5, %6 : vector<8x32xf32>
    %c0_6 = arith.constant 0 : index
    %c0_7 = arith.constant 0 : index
    %8 = vector.load %arg3[%c0_6, %c0_7] : memref<32x32xf32, #tpu.memory_space<vmem>>, vector<32x32xf32>
    %c0_8 = arith.constant 0 : index
    %c0_9 = arith.constant 0 : index
    %9 = vector.load %arg4[%c0_8, %c0_9] : memref<1x32xf32, #tpu.memory_space<vmem>>, vector<1x32xf32>
    %cst_10 = arith.constant dense<0.000000e+00> : vector<8x32xf32>
    %10 = tpu.matmul %7, %8, %cst_10 {dimension_numbers = #tpu.dot_dimension_numbers<[1], [0], [0], [1], [0, 0, 1, 1], [], []>} : vector<8x32xf32>, vector<32x32xf32>, vector<8x32xf32> -> vector<8x32xf32>
    %11 = vector.broadcast %9 : vector<1x32xf32> to vector<8x32xf32>
    %12 = arith.addf %10, %11 : vector<8x32xf32>
    %cst_11 = arith.constant 0.000000e+00 : f32
    %13 = vector.broadcast %cst_11 : f32 to vector<8x32xf32>
    %14 = arith.maximumf %12, %13 : vector<8x32xf32>
    %c0_12 = arith.constant 0 : index
    %c0_13 = arith.constant 0 : index
    %15 = vector.load %arg5[%c0_12, %c0_13] : memref<32x8xf32, #tpu.memory_space<vmem>>, vector<32x8xf32>
    %c0_14 = arith.constant 0 : index
    %c0_15 = arith.constant 0 : index
    %16 = vector.load %arg6[%c0_14, %c0_15] : memref<1x8xf32, #tpu.memory_space<vmem>>, vector<1x8xf32>
    %cst_16 = arith.constant dense<0.000000e+00> : vector<8x8xf32>
    %17 = tpu.matmul %14, %15, %cst_16 {dimension_numbers = #tpu.dot_dimension_numbers<[1], [0], [0], [1], [0, 0, 1, 1], [], []>} : vector<8x32xf32>, vector<32x8xf32>, vector<8x8xf32> -> vector<8x8xf32>
    %18 = vector.broadcast %16 : vector<1x8xf32> to vector<8x8xf32>
    %19 = arith.addf %17, %18 : vector<8x8xf32>
    %c0_17 = arith.constant 0 : index
    %c0_18 = arith.constant 0 : index
    %20 = vector.load %arg7[%c0_17, %c0_18] : memref<8x8xf32, #tpu.memory_space<vmem>>, vector<8x8xf32>
    tpu.vector_store %arg7[%c0_17, %c0_18], %19 {strides = array<i32>} : memref<8x8xf32, #tpu.memory_space<vmem>>, vector<8x8xf32>,
    return
  }
}

</mosaic_0001>

<llo_original>
// kernel: tpu_custom_call.1
$region0: #{tpu_custom_call.1}
  #allocation0 [shape = 'u32[]', space=smem, size = 0x4, offset = 0x4, fixed_abs, tag = 'smem constant byte address 0x4 - core index']
  #allocation1 [shape = 'u32[72,128]{1,0:T(1,128)}', space=vmem, size = 0x9000, scoped, tag = 'internal scratch']
  %s0 = inlined_call_operand.vmem [shape: f32[8,16], index: 0, kind: input, shape index: {}]
  %s1 = inlined_call_operand.hbm [shape: f32[16,32], index: 1, kind: input, shape index: {}]
  %s2 = inlined_call_operand.vmem [shape: f32[1,32], index: 2, kind: input, shape index: {}]
  %s3 = inlined_call_operand.vmem [shape: f32[32,32], index: 3, kind: input, shape index: {}]
  %s4 = inlined_call_operand.vmem [shape: f32[1,32], index: 4, kind: input, shape index: {}]
  %s5 = inlined_call_operand.vmem [shape: f32[32,8], index: 5, kind: input, shape index: {}]
  %s6 = inlined_call_operand.vmem [shape: f32[1,8], index: 6, kind: input, shape index: {}]
  %s7 = inlined_call_operand.hbm [shape: f32[8,8], index: 7, kind: output, shape index: {}]
  %s8 = sld [smem:[#allocation0]]
  $region42: #{tpu_custom_call.1} parent=0
    _
  %s10 = ssub.s32 1, %s8
  %s11 = scalar_select 0, %s10, %s8
  $region1: #{tpu_custom_call.1} parent=0
    #allocation2 [shape = 'u8[8192]{0}', space=vmem, size = 0x2000, scoped, tag = 'input window, operand 1, single buffered']
    #allocation3 [shape = 's32[1]{0}', space=sflag, size = 0x4, scoped, tag = 'scoped memory for tpu_custom_call.1']
    #allocation4 [shape = 's32[1]{0}', space=sflag, size = 0x4, scoped, tag = 'scoped memory for tpu_custom_call.1']
    #allocation5 [shape = 'u8[4096]{0}', space=vmem, size = 0x1000, scoped, tag = 'output window, operand 0, single buffered']
    %12 = vsyncpa [#allocation3], 0
    %13 = vsyncpa [#allocation4], 0
    // Predicated region
    $region2: #{tpu_custom_call.1} parent=1 // pred_check
      _
    $region3: #{tpu_custom_call.1} parent=1 // pred_check_branch
      %15 = sbr.rel (0) target = $region5
    $region4: #{tpu_custom_call.1} parent=1 // pred_region
      _
    $region5: #{tpu_custom_call.1} parent=1 // pred_fallthru
      _
    // Predicated region
    $region6: #{tpu_custom_call.1} parent=1 // pred_check
      _
    $region7: #{tpu_custom_call.1} parent=1 // pred_check_branch
      %17 = sbr.rel (0) target = $region9
    $region8: #{tpu_custom_call.1} parent=1 // pred_region
      %19 = vsyncadd [#allocation3], 0
      %s20 = sshll.u32 %s1, 4
      %s21 = int_to_ptr.hbm [resolvable:$true] %s20
      %s22 = sshll.u32 [#allocation2], 4
      %s23 = int_to_ptr.vmem [resolvable:$true] %s22
      %28 = dma.hbm_to_vmem [thread:$0]  %s21, 256, %s23, [#allocation3], 128, 128, 8
    $region9: #{tpu_custom_call.1} parent=1 // pred_fallthru
      _
    // Predicated region
    $region10: #{tpu_custom_call.1} parent=1 // pred_check
      _
    $region11: #{tpu_custom_call.1} parent=1 // pred_check_branch
      %30 = sbr.rel (0) target = $region13
    $region12: #{tpu_custom_call.1} parent=1 // pred_region
      _
    $region13: #{tpu_custom_call.1} parent=1 // pred_fallthru
      _
    // Predicated region
    $region14: #{tpu_custom_call.1} parent=1 // pred_check
      _
    $region15: #{tpu_custom_call.1} parent=1 // pred_check_branch
      %32 = sbr.rel (0) target = $region17
    $region16: #{tpu_custom_call.1} parent=1 // pred_region
      _
    $region17: #{tpu_custom_call.1} parent=1 // pred_fallthru
      _
    // Predicated region
    $region18: #{tpu_custom_call.1} parent=1 // pred_check
      _
    $region19: #{tpu_custom_call.1} parent=1 // pred_check_branch
      %34 = sbr.rel (0) target = $region21
    $region20: #{tpu_custom_call.1} parent=1 // pred_region
      _
    $region21: #{tpu_custom_call.1} parent=1 // pred_fallthru
      _
    // Predicated region
    $region22: #{tpu_custom_call.1} parent=1 // pred_check
      _
    $region23: #{tpu_custom_call.1} parent=1 // pred_check_branch
      %36 = sbr.rel (0) target = $region25
    $region24: #{tpu_custom_call.1} parent=1 // pred_region
      _
    $region25: #{tpu_custom_call.1} parent=1 // pred_fallthru
      _
    // Predicated region
    $region26: #{tpu_custom_call.1} parent=1 // pred_check
      _
    $region27: #{tpu_custom_call.1} parent=1 // pred_check_branch
      %38 = sbr.rel (0) target = $region29
    $region28: #{tpu_custom_call.1} parent=1 // pred_region
      _
    $region29: #{tpu_custom_call.1} parent=1 // pred_fallthru
      _
    // Predicated region
    $region30: #{tpu_custom_call.1} parent=1 // pred_check
      _
    $region31: #{tpu_custom_call.1} parent=1 // pred_check_branch
      %40 = sbr.rel (0) target = $region33
    $region32: #{tpu_custom_call.1} parent=1 // pred_region
      %42 = dma.done [#allocation3], 256
    $region33: #{tpu_custom_call.1} parent=1 // pred_fallthru
      _
    %v43 = vld [vmem:[%s0] sm:$0xff]
    %v44 = vld [vmem:[#allocation2] sm:$0xff]
    %v45 = vld [vmem:[#allocation2 + $0x8] sm:$0xff]
    %v46 = vld [vmem:[%s2] sm:$0x1]
    %v48 = vperm.slane %v46, 0
    %vm50 = vcmask 130048
    %v52 = vsel %vm50, %v43, 0
    %54 = vmatpush.msra.mxu0 0.0
    %55 = vmatpush.msra.mxu0 0.0
    %56 = vmatpush.msra.mxu0 0.0
    %57 = vmatpush.msra.mxu0 0.0
    %58 = vmatpush.msra.mxu0 0.0
    %59 = vmatpush.msra.mxu0 0.0
    %60 = vmatpush.msra.mxu0 0.0
    %61 = vmatpush.msra.mxu0 0.0
    %62 = vmatpush.msra.mxu0 0.0
    %63 = vmatpush.msra.mxu0 0.0
    %64 = vmatpush.msra.mxu0 0.0
    %65 = vmatpush.msra.mxu0 0.0
    %66 = vmatpush.msra.mxu0 0.0
    %67 = vmatpush.msra.mxu0 0.0
    %68 = vmatpush.msra.mxu0 %v45
    %69 = vmatpush.msra.mxu0 %v44
    %70 = vmatmul.f32.gmra.mxu0 %v52
    %v71 = vpop.f32.mrf.mxu0
    %v72 = vadd.f32 %v48, %v71
    %73 = vdwg.mxu0
    %v74 = vmax.f32 %v72, 0.0
    %v75 = vld [vmem:[%s3] sm:$0xff]
    %v76 = vld [vmem:[%s3 + $0x8] sm:$0xff]
    %v77 = vld [vmem:[%s3 + $0x10] sm:$0xff]
    %v78 = vld [vmem:[%s3 + $0x18] sm:$0xff]
    %v79 = vld [vmem:[%s4] sm:$0x1]
    %v81 = vperm.slane %v79, 0
    %vm83 = vcmask 261120
    %v85 = vsel %vm83, %v74, 0
    %87 = vmatpush.msra.mxu0 0.0
    %88 = vmatpush.msra.mxu0 0.0
    %89 = vmatpush.msra.mxu0 0.0
    %90 = vmatpush.msra.mxu0 0.0
    %91 = vmatpush.msra.mxu0 0.0
    %92 = vmatpush.msra.mxu0 0.0
    %93 = vmatpush.msra.mxu0 0.0
    %94 = vmatpush.msra.mxu0 0.0
    %95 = vmatpush.msra.mxu0 0.0
    %96 = vmatpush.msra.mxu0 0.0
    %97 = vmatpush.msra.mxu0 0.0
    %98 = vmatpush.msra.mxu0 0.0
    %99 = vmatpush.msra.mxu0 %v78
    %100 = vmatpush.msra.mxu0 %v77
    %101 = vmatpush.msra.mxu0 %v76
    %102 = vmatpush.msra.mxu0 %v75
    %103 = vmatmul.f32.gmra.mxu0 %v85
    %v104 = vpop.f32.mrf.mxu0
    %v105 = vadd.f32 %v81, %v104
    %106 = vdwg.mxu0
    %v107 = vmax.f32 %v105, 0.0
    %v108 = vld [vmem:[%s5] sm:$0xff]
    %v109 = vld [vmem:[%s5 + $0x8] sm:$0xff]
    %v110 = vld [vmem:[%s5 + $0x10] sm:$0xff]
    %v111 = vld [vmem:[%s5 + $0x18] sm:$0xff]
    %v112 = vld [vmem:[%s6] sm:$0x1]
    %v114 = vperm.slane %v112, 0
    %v117 = vsel %vm83, %v107, 0
    %119 = vmatpush.msra.mxu0 0.0
    %120 = vmatpush.msra.mxu0 0.0
    %121 = vmatpush.msra.mxu0 0.0
    %122 = vmatpush.msra.mxu0 0.0
    %123 = vmatpush.msra.mxu0 0.0
    %124 = vmatpush.msra.mxu0 0.0
    %125 = vmatpush.msra.mxu0 0.0
    %126 = vmatpush.msra.mxu0 0.0
    %127 = vmatpush.msra.mxu0 0.0
    %128 = vmatpush.msra.mxu0 0.0
    %129 = vmatpush.msra.mxu0 0.0
    %130 = vmatpush.msra.mxu0 0.0
    %131 = vmatpush.msra.mxu0 %v111
    %132 = vmatpush.msra.mxu0 %v110
    %133 = vmatpush.msra.mxu0 %v109
    %134 = vmatpush.msra.mxu0 %v108
    %135 = vmatmul.f32.gmra.mxu0 %v117
    %v136 = vpop.f32.mrf.mxu0
    %v137 = vadd.f32 %v114, %v136
    %138 = vdwg.mxu0
    %vm139 = vcmask 64512
    %140 = vst.msk [vmem:[#allocation5] sm:$0xff] %vm139, %v137
    // Predicated region
    $region34: #{tpu_custom_call.1} parent=1 // pred_check
      _
    $region35: #{tpu_custom_call.1} parent=1 // pred_check_branch
      %142 = sbr.rel (0) target = $region37
    $region36: #{tpu_custom_call.1} parent=1 // pred_region
      %144 = vsyncadd [#allocation4], 0
      %s146 = sshll.u32 [#allocation5], 4
      %s147 = int_to_ptr.vmem [resolvable:$true] %s146
      %s148 = sshll.u32 %s7, 4
      %s149 = int_to_ptr.hbm [resolvable:$true] %s148
      %151 = dma.vmem_to_hbm [thread:$0]  %s147, 128, %s149, [#allocation4]
    $region37: #{tpu_custom_call.1} parent=1 // pred_fallthru
      _
    // Predicated region
    $region38: #{tpu_custom_call.1} parent=1 // pred_check
      _
    $region39: #{tpu_custom_call.1} parent=1 // pred_check_branch
      %153 = sbr.rel (0) target = $region41
    $region40: #{tpu_custom_call.1} parent=1 // pred_region
      %155 = dma.done [#allocation4], 128
    $region41: #{tpu_custom_call.1} parent=1 // pred_fallthru
      _
    %156 = vsyncpa [#allocation3], 1
    %157 = vsyncpa [#allocation4], 1

</llo_original>
